<compile_context>
chip_gen: v5e
topology: v5e:2x2
jax: 0.10.0
libtpu: 0.0.40
codegen_flags: <defaults>
</compile_context>

<pallas_src>
import math

import jax
import jax.numpy as jnp
from jax.experimental import pallas as pl
from jax.experimental.pallas import tpu as pltpu


def _decoder_kernel(x_ref, w_ref, b_ref, o_ref):
    x = x_ref[...]                       # [tm, K]
    w = w_ref[...]                       # [K, N] (already compute dtype)
    if x.dtype != w.dtype:
        x = x.astype(w.dtype)            # per-tile cast only (bf16 path)
    y = jnp.dot(x, w, preferred_element_type=jnp.float32)   # MXU, f32 acc
    y = y + b_ref[...].astype(jnp.float32)                   # [1, N] broadcast
    o_ref[...] = y.astype(o_ref.dtype)


def _round_up(v, m):
    return ((v + m - 1) // m) * m


def _sublane(dtype):
    # min sublane tile: 8 for 32-bit, 16 for bf16, 32 for 8-bit dtypes
    return max(8, 32 // jnp.dtype(dtype).itemsize)


def decoder_forward(data, w, b, *, compute_dtype=None, tm_max=1024,
                    vmem_budget_bytes=24 * 1024 * 1024):
    """data: [..., latent_dim]; w: [latent_dim, input_dim]; b: [input_dim]."""
    *lead, K = data.shape
    Kw, N = w.shape
    assert Kw == K
    M = int(math.prod(lead)) if lead else 1

    x2 = data.reshape(M, K)
    b2 = b.reshape(1, N)
    if compute_dtype is not None:
        # Hoist the constant weight cast out of the kernel (done once, not
        # once per grid step).  Accumulation stays f32 in the kernel.
        w = w.astype(compute_dtype)

    sub = _sublane(data.dtype)
    in_bytes = jnp.dtype(data.dtype).itemsize
    out_bytes = in_bytes

    # VMEM guard: resident (double-buffered) weight + bias, plus
    # double-buffered input/output row tiles must fit the scoped budget
    # (v7x halves physical VMEM vs v5e/v6e).
    const_bytes = 2 * (w.size * w.dtype.itemsize + b2.size * b2.dtype.itemsize)
    per_row = 2 * (K * in_bytes + N * out_bytes)
    tm_vmem = max(sub, ((vmem_budget_bytes - const_bytes) // per_row) // sub * sub)

    tm = min(_round_up(M, sub), tm_max, tm_vmem)
    if M >= 128:
        # Guarantee >= 2 parallel row tiles so both v7x TensorCores get work.
        tm = min(tm, _round_up(pl.cdiv(M, 2), sub))
    n_row_tiles = pl.cdiv(M, tm)

    cost = pl.CostEstimate(
        flops=2 * M * K * N,
        transcendentals=0,
        bytes_accessed=(M * K * in_bytes
                        + w.size * w.dtype.itemsize
                        + N * b2.dtype.itemsize
                        + M * N * out_bytes),
    )

    out = pl.pallas_call(
        _decoder_kernel,
        out_shape=jax.ShapeDtypeStruct((M, N), data.dtype),
        grid_spec=pl.GridSpec(
            grid=(n_row_tiles,),
            in_specs=[
                # Full-extent K/N block dims: legal (equal to full array dims),
                # no padding, ragged last row tile is masked by Pallas.
                pl.BlockSpec((tm, K), lambda i: (i, 0)),   # activations
                pl.BlockSpec((K, N), lambda i: (0, 0)),    # weight (resident)
                pl.BlockSpec((1, N), lambda i: (0, 0)),    # bias   (resident)
            ],
            out_specs=pl.BlockSpec((tm, N), lambda i: (i, 0)),
        ),
        compiler_params=pltpu.CompilerParams(
            dimension_semantics=("parallel",)),
        cost_estimate=cost,
    )(x2, w, b2)

    return out.reshape(*lead, N) if lead else out.reshape(N)


def init_params(key, latent_dim, input_dim):
    """Mimic utils.init_network_weights: W ~ N(0, 0.1), b = 0."""
    w = 0.1 * jax.random.normal(key, (latent_dim, input_dim), jnp.float32)
    b = jnp.zeros((input_dim,), jnp.float32)
    return w, b


if __name__ == "__main__":
    latent_dim = 32
    input_dim = 16
    n_traj_samples, n_traj, n_tp = 4, 8, 16   # M = 512 rows -> grid = (2,)

    key = jax.random.PRNGKey(0)
    k_data, k_w = jax.random.split(key)

    data = jax.random.normal(
        k_data, (n_traj_samples, n_traj, n_tp, latent_dim), jnp.float32)
    w, b = init_params(k_w, latent_dim, input_dim)

    ref = data @ w + b

    # Default f32 path (bit-accurate vs the PyTorch reference).
    out = decoder_forward(data, w, b)
    jax.block_until_ready(out)
    assert out.shape == ref.shape
    assert jnp.allclose(out, ref, atol=1e-5, rtol=1e-5)
    assert not bool(jnp.isnan(out).any())

    # Ragged-M case (non-multiple of the tile / sublane): exercises masked
    # last-tile writeback with no wrapper padding.
    data_rag = data[:, :, :13]                # M = 4*8*13 = 416
    out_rag = decoder_forward(data_rag, w, b)
    jax.block_until_ready(out_rag)
    assert jnp.allclose(out_rag, data_rag @ w + b, atol=1e-5, rtol=1e-5)

    # Optional bf16-operand path (v6e/v7x MXU rate), f32 accumulation.
    # TODO(synk): skip this path on v5e — no bf16 VPU, no benefit at this size.
    out_bf16 = decoder_forward(data, w, b, compute_dtype=jnp.bfloat16)
    jax.block_until_ready(out_bf16)
    assert jnp.allclose(out_bf16, ref, atol=3e-2, rtol=3e-2)

    print("KERNEL_OK")
</pallas_src>

<mosaic_0001>
module attributes {stable_mosaic.version = 11 : i64} {
  func.func @_decoder_kernel(%arg0: i32, %arg1: memref<256x32xf32, #tpu.memory_space<vmem>>, %arg2: memref<32x16xf32, #tpu.memory_space<vmem>>, %arg3: memref<1x16xf32, #tpu.memory_space<vmem>>, %arg4: memref<256x16xf32, #tpu.memory_space<vmem>>) attributes {dimension_semantics = [#tpu.dimension_semantics<parallel>], iteration_bounds = array<i64: 2>, scalar_prefetch = 0 : i64, scratch_operands = 0 : i64, tpu.core_type = #tpu.core_type<tc>, window_params = [{transform_indices = @transform_0, window_bounds = array<i64: 256, 32>}, {pipeline_mode = #tpu.pipeline_mode<synchronous>, transform_indices = @transform_1, window_bounds = array<i64: 32, 16>}, {pipeline_mode = #tpu.pipeline_mode<synchronous>, transform_indices = @transform_2, window_bounds = array<i64: 1, 16>}, {transform_indices = @transform_3, window_bounds = array<i64: 256, 16>}]} {
    %c0 = arith.constant 0 : index
    %c0_0 = arith.constant 0 : index
    %0 = vector.load %arg1[%c0, %c0_0] : memref<256x32xf32, #tpu.memory_space<vmem>>, vector<256x32xf32>
    %c0_1 = arith.constant 0 : index
    %c0_2 = arith.constant 0 : index
    %1 = vector.load %arg2[%c0_1, %c0_2] : memref<32x16xf32, #tpu.memory_space<vmem>>, vector<32x16xf32>
    %cst = arith.constant dense<0.000000e+00> : vector<256x16xf32>
    %2 = tpu.matmul %0, %1, %cst {dimension_numbers = #tpu.dot_dimension_numbers<[1], [0], [0], [1], [0, 0, 1, 1], [], []>} : vector<256x32xf32>, vector<32x16xf32>, vector<256x16xf32> -> vector<256x16xf32>
    %c0_3 = arith.constant 0 : index
    %c0_4 = arith.constant 0 : index
    %3 = vector.load %arg3[%c0_3, %c0_4] : memref<1x16xf32, #tpu.memory_space<vmem>>, vector<1x16xf32>
    %4 = vector.broadcast %3 : vector<1x16xf32> to vector<256x16xf32>
    %5 = arith.addf %2, %4 : vector<256x16xf32>
    %c0_5 = arith.constant 0 : index
    %c0_6 = arith.constant 0 : index
    %6 = vector.load %arg4[%c0_5, %c0_6] : memref<256x16xf32, #tpu.memory_space<vmem>>, vector<256x16xf32>
    tpu.vector_store %arg4[%c0_5, %c0_6], %5 {strides = array<i32>} : memref<256x16xf32, #tpu.memory_space<vmem>>, vector<256x16xf32>,
    return
  }
  func.func @transform_0(%arg0: i32) -> (i32, i32) {
    %c0_i32 = arith.constant 0 : i32
    %c0_i32_0 = arith.constant 0 : i32
    return %arg0, %c0_i32 : i32, i32
  }
  func.func @transform_1(%arg0: i32) -> (i32, i32) {
    %c0_i32 = arith.constant 0 : i32
    %c0_i32_0 = arith.constant 0 : i32
    %c0_i32_1 = arith.constant 0 : i32
    return %c0_i32, %c0_i32_0 : i32, i32
  }
  func.func @transform_2(%arg0: i32) -> (i32, i32) {
    %c0_i32 = arith.constant 0 : i32
    %c0_i32_0 = arith.constant 0 : i32
    %c0_i32_1 = arith.constant 0 : i32
    return %c0_i32, %c0_i32_0 : i32, i32
  }
  func.func @transform_3(%arg0: i32) -> (i32, i32) {
    %c0_i32 = arith.constant 0 : i32
    %c0_i32_0 = arith.constant 0 : i32
    return %arg0, %c0_i32 : i32, i32
  }
}

</mosaic_0001>

<llo_original>
// kernel: tpu_custom_call.1
$region0: #{tpu_custom_call.1}
  #allocation0 [shape = 'u32[]', space=smem, size = 0x4, offset = 0x4, fixed_abs, tag = 'smem constant byte address 0x4 - core index']
  #allocation1 [shape = 'u32[72,128]{1,0:T(1,128)}', space=vmem, size = 0x9000, scoped, tag = 'internal scratch']
  %s0 = inlined_call_operand.vmem [shape: f32[512,32], index: 0, kind: input, shape index: {}]
  %s1 = inlined_call_operand.vmem [shape: f32[32,16], index: 1, kind: input, shape index: {}]
  %s2 = inlined_call_operand.vmem [shape: f32[1,16], index: 2, kind: input, shape index: {}]
  %s3 = inlined_call_operand.vmem [shape: f32[512,16], index: 3, kind: output, shape index: {}]
  %s4 = sld [smem:[#allocation0]]
  $region45: #{tpu_custom_call.1} parent=0
    _
  %s6 = ssub.s32 1, %s4
  %s7 = scalar_select 0, %s6, %s4
  loop: start=0, step=1, limit=4
  $region2: #{tpu_custom_call.1} parent=0 // loop_pre_header
    _
  $region3: #{tpu_custom_call.1} parent=0 // loop_header
    %s9 = sphi 0, %s13
    %p10 = scmp.ge.s32.totalorder %s9, 4
    %s19 = sphi 0, %s21
    %s22 = sphi 0, %s19
    %s23 = sphi 0, %s22
    %s39 = sphi 0, %s23
    %s43 = sphi 0, %s43
    %s45 = sphi 0, %s43
    %s46 = sphi 0, %s45
    %s60 = sphi 0, %s46
    %s64 = sphi 0, %s64
    %s66 = sphi 0, %s64
    %s67 = sphi 0, %s66
    %s81 = sphi 0, %s67
    %s87 = sphi 0, %s89
    %s90 = sphi 0, %s87
    %s91 = sphi 0, %s90
    %s107 = sphi 0, %s91
  $region4: #{tpu_custom_call.1} parent=0 // loop_header_branch
    %12 = sbr.rel (%p10) target = $region8
  $region5: #{tpu_custom_call.1} parent=0 // loop_body
    %s14 = ssub.s32 %s9, 1
    %s15 = ssub.s32 %s9, 2
    %s16 = sadd.s32 %s9, 1
    %s17 = ssub.s32 %s9, %s16
    %p18 = scmp.eq.s32.totalorder %s17, 0
    %s20 = sadd.s32 %s19, 1
    %s21 = scalar_select %p18, %s19, %s20
    %p24 = pneg %p18
    %p25 = scmp.eq.s32.totalorder %s9, 1
    %p26 = por %p24, %p25
    %p27 = scmp.ne.s32.totalorder %s19, %s22
    %p28 = scmp.eq.s32.totalorder %s9, 0
    %p29 = por %p27, %p28
    %p30 = scmp.ne.s32.totalorder %s19, %s22
    %p31 = scmp.eq.s32.totalorder %s14, 1
    %p32 = por %p30, %p31
    %p33 = scmp.ne.s32.totalorder %s22, %s23
    %p34 = scmp.eq.s32.totalorder %s14, 0
    %p35 = por %p33, %p34
    %p36 = scmp.ne.s32.totalorder %s22, %s23
    %p37 = scmp.eq.s32.totalorder %s15, 1
    %p38 = por %p36, %p37
    %p40 = scmp.ne.s32.totalorder %s23, %s39
    %p41 = scmp.eq.s32.totalorder %s15, 0
    %p42 = por %p40, %p41
    %s44 = sadd.s32 %s43, 1
    %p47 = scmp.eq.s32.totalorder %s9, 1
    %p48 = scmp.ne.s32.totalorder %s43, %s45
    %p49 = scmp.eq.s32.totalorder %s9, 0
    %p50 = por %p48, %p49
    %p51 = scmp.ne.s32.totalorder %s43, %s45
    %p52 = scmp.eq.s32.totalorder %s14, 1
    %p53 = por %p51, %p52
    %p54 = scmp.ne.s32.totalorder %s45, %s46
    %p55 = scmp.eq.s32.totalorder %s14, 0
    %p56 = por %p54, %p55
    %p57 = scmp.ne.s32.totalorder %s45, %s46
    %p58 = scmp.eq.s32.totalorder %s15, 1
    %p59 = por %p57, %p58
    %p61 = scmp.ne.s32.totalorder %s46, %s60
    %p62 = scmp.eq.s32.totalorder %s15, 0
    %p63 = por %p61, %p62
    %s65 = sadd.s32 %s64, 1
    %p68 = scmp.eq.s32.totalorder %s9, 1
    %p69 = scmp.ne.s32.totalorder %s64, %s66
    %p70 = scmp.eq.s32.totalorder %s9, 0
    %p71 = por %p69, %p70
    %p72 = scmp.ne.s32.totalorder %s64, %s66
    %p73 = scmp.eq.s32.totalorder %s14, 1
    %p74 = por %p72, %p73
    %p75 = scmp.ne.s32.totalorder %s66, %s67
    %p76 = scmp.eq.s32.totalorder %s14, 0
    %p77 = por %p75, %p76
    %p78 = scmp.ne.s32.totalorder %s66, %s67
    %p79 = scmp.eq.s32.totalorder %s15, 1
    %p80 = por %p78, %p79
    %p82 = scmp.ne.s32.totalorder %s67, %s81
    %p83 = scmp.eq.s32.totalorder %s15, 0
    %p84 = por %p82, %p83
    %s85 = ssub.s32 %s9, %s16
    %p86 = scmp.eq.s32.totalorder %s85, 0
    %s88 = sadd.s32 %s87, 1
    %s89 = scalar_select %p86, %s87, %s88
    %p92 = pneg %p86
    %p93 = scmp.eq.s32.totalorder %s9, 1
    %p94 = por %p92, %p93
    %p95 = scmp.ne.s32.totalorder %s87, %s90
    %p96 = scmp.eq.s32.totalorder %s9, 0
    %p97 = por %p95, %p96
    %p98 = scmp.ne.s32.totalorder %s87, %s90
    %p99 = scmp.eq.s32.totalorder %s14, 1
    %p100 = por %p98, %p99
    %p101 = scmp.ne.s32.totalorder %s90, %s91
    %p102 = scmp.eq.s32.totalorder %s14, 0
    %p103 = por %p101, %p102
    %p104 = scmp.ne.s32.totalorder %s90, %s91
    %p105 = scmp.eq.s32.totalorder %s15, 1
    %p106 = por %p104, %p105
    %p108 = scmp.ne.s32.totalorder %s91, %s107
    %p109 = scmp.eq.s32.totalorder %s15, 0
    %p110 = por %p108, %p109
    %p111 = scmp.le.s32.totalorder 1, %s9
    %p112 = scmp.lt.s32.totalorder %s9, 3
    %p113 = pnand %p111, %p112
    %p114 = pneg %p113
    // Predicated region
    $region9: #{tpu_custom_call.1} parent=5 // pred_check
      _
    $region10: #{tpu_custom_call.1} parent=5 // pred_check_branch
      %116 = sbr.rel (%p113) target = $region12
    $region11: #{tpu_custom_call.1} parent=5 // pred_region
      %s117 = ssub.s32 %s9, 1
      // Predicated region
      $region13: #{tpu_custom_call.1} parent=11 // pred_check
        %p118 = pneg %p56
      $region14: #{tpu_custom_call.1} parent=11 // pred_check_branch
        %120 = sbr.rel (%p118) target = $region16
      $region15: #{tpu_custom_call.1} parent=11 // pred_region
        _
      $region16: #{tpu_custom_call.1} parent=11 // pred_fallthru
        _
      // Predicated region
      $region17: #{tpu_custom_call.1} parent=11 // pred_check
        %p121 = pneg %p77
      $region18: #{tpu_custom_call.1} parent=11 // pred_check_branch
        %123 = sbr.rel (%p121) target = $region20
      $region19: #{tpu_custom_call.1} parent=11 // pred_region
        _
      $region20: #{tpu_custom_call.1} parent=11 // pred_fallthru
        _
    $region12: #{tpu_custom_call.1} parent=5 // pred_fallthru
      _
    %p124 = scmp.lt.s32.totalorder %s9, 2
    // Predicated region
    $region21: #{tpu_custom_call.1} parent=5 // pred_check
      %p125 = pneg %p124
    $region22: #{tpu_custom_call.1} parent=5 // pred_check_branch
      %127 = sbr.rel (%p125) target = $region24
    $region23: #{tpu_custom_call.1} parent=5 // pred_region
      // Predicated region
      $region25: #{tpu_custom_call.1} parent=23 // pred_check
        %p128 = pneg %p29
      $region26: #{tpu_custom_call.1} parent=23 // pred_check_branch
        %130 = sbr.rel (%p128) target = $region28
      $region27: #{tpu_custom_call.1} parent=23 // pred_region
        %s131 = smul.u32 32, %s9
        %p132 = scmp.lt.s32.totalorder %s131, 63
        %s133 = scalar_select %p132, %s131, 63
        %s134 = smul.addr %s133, 8
        %s135 = scalar_lea.vmem %s0, %s134
        %s136 = smul.u32 32, %s9
      $region28: #{tpu_custom_call.1} parent=23 // pred_fallthru
        _
    $region24: #{tpu_custom_call.1} parent=5 // pred_fallthru
      _
    %p137 = scmp.le.s32.totalorder 1, %s9
    %p138 = scmp.lt.s32.totalorder %s9, 3
    %p139 = pnand %p137, %p138
    %p140 = pneg %p139
    // Predicated region
    $region29: #{tpu_custom_call.1} parent=5 // pred_check
      _
    $region30: #{tpu_custom_call.1} parent=5 // pred_check_branch
      %142 = sbr.rel (%p139) target = $region32
    $region31: #{tpu_custom_call.1} parent=5 // pred_region
      %s143 = ssub.s32 %s9, 1
      %s144 = smul.u32 32, %s14
      %p145 = scmp.lt.s32.totalorder %s144, 63
      %s146 = scalar_select %p145, %s144, 63
      %s147 = smul.addr %s146, 8
      %s148 = scalar_lea.vmem %s0, %s147
      %p149 = pneg %p35
      %p150 = pneg %p32
      %p151 = pneg %p56
      %p152 = pneg %p53
      %p153 = pneg %p77
      %p154 = pneg %p74
      %p155 = pneg %p103
      %p156 = pneg %p100
      %s157 = smul.u32 32, %s14
      %p158 = scmp.lt.s32.totalorder %s157, 63
      %s159 = scalar_select %p158, %s157, 63
      %s160 = smul.addr %s159, 8
      %s161 = scalar_lea.vmem %s3, %s160
      %s162 = smul.u32 32, %s14
      %p163 = scmp.lt.s32.totalorder %s162, 63
      %s164 = scalar_select %p163, %s162, 63
      %s165 = smul.addr %s164, 8
      %s166 = scalar_lea.vmem %s0, %s165
      %s167 = smul.u32 32, %s14
      %s168 = smul.u32 32, %s14
      %p169 = scmp.lt.s32.totalorder %s168, 63
      %s170 = scalar_select %p169, %s168, 63
      %s171 = smul.addr %s170, 8
      %s172 = scalar_lea.vmem %s3, %s171
      %s173 = smul.u32 32, %s14
      %v174 = vld [vmem:[%s166] sm:$0xff]
      %v175 = vld [vmem:[%s166 + $0x8] sm:$0xff]
      %v176 = vld [vmem:[%s166 + $0x10] sm:$0xff]
      %v177 = vld [vmem:[%s166 + $0x18] sm:$0xff]
      %v178 = vld [vmem:[%s166 + $0x20] sm:$0xff]
      %v179 = vld [vmem:[%s166 + $0x28] sm:$0xff]
      %v180 = vld [vmem:[%s166 + $0x30] sm:$0xff]
      %v181 = vld [vmem:[%s166 + $0x38] sm:$0xff]
      %v182 = vld [vmem:[%s166 + $0x40] sm:$0xff]
      %v183 = vld [vmem:[%s166 + $0x48] sm:$0xff]
      %v184 = vld [vmem:[%s166 + $0x50] sm:$0xff]
      %v185 = vld [vmem:[%s166 + $0x58] sm:$0xff]
      %v186 = vld [vmem:[%s166 + $0x60] sm:$0xff]
      %v187 = vld [vmem:[%s166 + $0x68] sm:$0xff]
      %v188 = vld [vmem:[%s166 + $0x70] sm:$0xff]
      %v189 = vld [vmem:[%s166 + $0x78] sm:$0xff]
      %v190 = vld [vmem:[%s166 + $0x80] sm:$0xff]
      %v191 = vld [vmem:[%s166 + $0x88] sm:$0xff]
      %v192 = vld [vmem:[%s166 + $0x90] sm:$0xff]
      %v193 = vld [vmem:[%s166 + $0x98] sm:$0xff]
      %v194 = vld [vmem:[%s166 + $0xa0] sm:$0xff]
      %v195 = vld [vmem:[%s166 + $0xa8] sm:$0xff]
      %v196 = vld [vmem:[%s166 + $0xb0] sm:$0xff]
      %v197 = vld [vmem:[%s166 + $0xb8] sm:$0xff]
      %v198 = vld [vmem:[%s166 + $0xc0] sm:$0xff]
      %v199 = vld [vmem:[%s166 + $0xc8] sm:$0xff]
      %v200 = vld [vmem:[%s166 + $0xd0] sm:$0xff]
      %v201 = vld [vmem:[%s166 + $0xd8] sm:$0xff]
      %v202 = vld [vmem:[%s166 + $0xe0] sm:$0xff]
      %v203 = vld [vmem:[%s166 + $0xe8] sm:$0xff]
      %v204 = vld [vmem:[%s166 + $0xf0] sm:$0xff]
      %v205 = vld [vmem:[%s166 + $0xf8] sm:$0xff]
      %v206 = vld [vmem:[%s1] sm:$0xff]
      %v207 = vld [vmem:[%s1 + $0x8] sm:$0xff]
      %v208 = vld [vmem:[%s1 + $0x10] sm:$0xff]
      %v209 = vld [vmem:[%s1 + $0x18] sm:$0xff]
      %v210 = vld [vmem:[%s2] sm:$0x1]
      %v212 = vperm.slane %v210, 0
      %vm214 = vcmask 261120
      %v216 = vsel %vm214, %v174, 0
      %v219 = vsel %vm214, %v175, 0
      %v222 = vsel %vm214, %v176, 0
      %v225 = vsel %vm214, %v177, 0
      %v228 = vsel %vm214, %v178, 0
      %v231 = vsel %vm214, %v179, 0
      %v234 = vsel %vm214, %v180, 0
      %v237 = vsel %vm214, %v181, 0
      %v240 = vsel %vm214, %v182, 0
      %v243 = vsel %vm214, %v183, 0
      %v246 = vsel %vm214, %v184, 0
      %v249 = vsel %vm214, %v185, 0
      %v252 = vsel %vm214, %v186, 0
      %v255 = vsel %vm214, %v187, 0
      %v258 = vsel %vm214, %v188, 0
      %v261 = vsel %vm214, %v189, 0
      %v264 = vsel %vm214, %v190, 0
      %v267 = vsel %vm214, %v191, 0
      %v270 = vsel %vm214, %v192, 0
      %v273 = vsel %vm214, %v193, 0
      %v276 = vsel %vm214, %v194, 0
      %v279 = vsel %vm214, %v195, 0
      %v282 = vsel %vm214, %v196, 0
      %v285 = vsel %vm214, %v197, 0
      %v288 = vsel %vm214, %v198, 0
      %v291 = vsel %vm214, %v199, 0
      %v294 = vsel %vm214, %v200, 0
      %v297 = vsel %vm214, %v201, 0
      %v300 = vsel %vm214, %v202, 0
      %v303 = vsel %vm214, %v203, 0
      %v306 = vsel %vm214, %v204, 0
      %v309 = vsel %vm214, %v205, 0
      %311 = vmatpush.msra.mxu0 0.0
      %312 = vmatpush.msra.mxu0 0.0
      %313 = vmatpush.msra.mxu0 0.0
      %314 = vmatpush.msra.mxu0 0.0
      %315 = vmatpush.msra.mxu0 0.0
      %316 = vmatpush.msra.mxu0 0.0
      %317 = vmatpush.msra.mxu0 0.0
      %318 = vmatpush.msra.mxu0 0.0
      %319 = vmatpush.msra.mxu0 0.0
      %320 = vmatpush.msra.mxu0 0.0
      %321 = vmatpush.msra.mxu0 0.0
      %322 = vmatpush.msra.mxu0 0.0
      %323 = vmatpush.msra.mxu0 %v209
      %324 = vmatpush.msra.mxu0 %v208
      %325 = vmatpush.msra.mxu0 %v207
      %326 = vmatpush.msra.mxu0 %v206
      %327 = vmatmul.f32.gmra.mxu0 %v216
      %v328 = vpop.f32.mrf.mxu0
      %v329 = vadd.f32 %v212, %v328
      %330 = vmatmul.f32.gmra.mxu0 %v219
      %v331 = vpop.f32.mrf.mxu0
      %v332 = vadd.f32 %v212, %v331
      %333 = vmatmul.f32.gmra.mxu0 %v222
      %v334 = vpop.f32.mrf.mxu0
      %v335 = vadd.f32 %v212, %v334
      %336 = vmatmul.f32.gmra.mxu0 %v225
      %v337 = vpop.f32.mrf.mxu0
      %v338 = vadd.f32 %v212, %v337
      %339 = vmatmul.f32.gmra.mxu0 %v228
      %v340 = vpop.f32.mrf.mxu0
      %v341 = vadd.f32 %v212, %v340
      %342 = vmatmul.f32.gmra.mxu0 %v231
      %v343 = vpop.f32.mrf.mxu0
      %v344 = vadd.f32 %v212, %v343
      %345 = vmatmul.f32.gmra.mxu0 %v234
      %v346 = vpop.f32.mrf.mxu0
      %v347 = vadd.f32 %v212, %v346
      %348 = vmatmul.f32.gmra.mxu0 %v237
      %v349 = vpop.f32.mrf.mxu0
      %v350 = vadd.f32 %v212, %v349
      %351 = vmatmul.f32.gmra.mxu0 %v240
      %v352 = vpop.f32.mrf.mxu0
      %v353 = vadd.f32 %v212, %v352
      %354 = vmatmul.f32.gmra.mxu0 %v243
      %v355 = vpop.f32.mrf.mxu0
      %v356 = vadd.f32 %v212, %v355
      %357 = vmatmul.f32.gmra.mxu0 %v246
      %v358 = vpop.f32.mrf.mxu0
      %v359 = vadd.f32 %v212, %v358
      %360 = vmatmul.f32.gmra.mxu0 %v249
      %v361 = vpop.f32.mrf.mxu0
      %v362 = vadd.f32 %v212, %v361
      %363 = vmatmul.f32.gmra.mxu0 %v252
      %v364 = vpop.f32.mrf.mxu0
      %v365 = vadd.f32 %v212, %v364
      %366 = vmatmul.f32.gmra.mxu0 %v255
      %v367 = vpop.f32.mrf.mxu0
      %v368 = vadd.f32 %v212, %v367
      %369 = vmatmul.f32.gmra.mxu0 %v258
      %v370 = vpop.f32.mrf.mxu0
      %v371 = vadd.f32 %v212, %v370
      %372 = vmatmul.f32.gmra.mxu0 %v261
      %v373 = vpop.f32.mrf.mxu0
      %v374 = vadd.f32 %v212, %v373
      %375 = vmatmul.f32.gmra.mxu0 %v264
      %v376 = vpop.f32.mrf.mxu0
      %v377 = vadd.f32 %v212, %v376
      %378 = vmatmul.f32.gmra.mxu0 %v267
      %v379 = vpop.f32.mrf.mxu0
      %v380 = vadd.f32 %v212, %v379
      %381 = vmatmul.f32.gmra.mxu0 %v270
      %v382 = vpop.f32.mrf.mxu0
      %v383 = vadd.f32 %v212, %v382
      %384 = vmatmul.f32.gmra.mxu0 %v273
      %v385 = vpop.f32.mrf.mxu0
      %v386 = vadd.f32 %v212, %v385
      %387 = vmatmul.f32.gmra.mxu0 %v276
      %v388 = vpop.f32.mrf.mxu0
      %v389 = vadd.f32 %v212, %v388
      %390 = vmatmul.f32.gmra.mxu0 %v279
      %v391 = vpop.f32.mrf.mxu0
      %v392 = vadd.f32 %v212, %v391
      %393 = vmatmul.f32.gmra.mxu0 %v282
      %v394 = vpop.f32.mrf.mxu0
      %v395 = vadd.f32 %v212, %v394
      %396 = vmatmul.f32.gmra.mxu0 %v285
      %v397 = vpop.f32.mrf.mxu0
      %v398 = vadd.f32 %v212, %v397
      %399 = vmatmul.f32.gmra.mxu0 %v288
      %v400 = vpop.f32.mrf.mxu0
      %v401 = vadd.f32 %v212, %v400
      %402 = vmatmul.f32.gmra.mxu0 %v291
      %v403 = vpop.f32.mrf.mxu0
      %v404 = vadd.f32 %v212, %v403
      %405 = vmatmul.f32.gmra.mxu0 %v294
      %v406 = vpop.f32.mrf.mxu0
      %v407 = vadd.f32 %v212, %v406
      %408 = vmatmul.f32.gmra.mxu0 %v297
      %v409 = vpop.f32.mrf.mxu0
      %v410 = vadd.f32 %v212, %v409
      %411 = vmatmul.f32.gmra.mxu0 %v300
      %v412 = vpop.f32.mrf.mxu0
      %v413 = vadd.f32 %v212, %v412
      %414 = vmatmul.f32.gmra.mxu0 %v303
      %v415 = vpop.f32.mrf.mxu0
      %v416 = vadd.f32 %v212, %v415
      %417 = vmatmul.f32.gmra.mxu0 %v306
      %v418 = vpop.f32.mrf.mxu0
      %v419 = vadd.f32 %v212, %v418
      %420 = vmatmul.f32.gmra.mxu0 %v309
      %v421 = vpop.f32.mrf.mxu0
      %v422 = vadd.f32 %v212, %v421
      %423 = vdwg.mxu0
      %vm424 = vcmask 130048
      %425 = vst.msk [vmem:[%s172] sm:$0xff] %vm424, %v329
      %426 = vst.msk [vmem:[%s172 + $0x8] sm:$0xff] %vm424, %v332
      %427 = vst.msk [vmem:[%s172 + $0x10] sm:$0xff] %vm424, %v335
      %428 = vst.msk [vmem:[%s172 + $0x18] sm:$0xff] %vm424, %v338
      %429 = vst.msk [vmem:[%s172 + $0x20] sm:$0xff] %vm424, %v341
      %430 = vst.msk [vmem:[%s172 + $0x28] sm:$0xff] %vm424, %v344
      %431 = vst.msk [vmem:[%s172 + $0x30] sm:$0xff] %vm424, %v347
      %432 = vst.msk [vmem:[%s172 + $0x38] sm:$0xff] %vm424, %v350
      %433 = vst.msk [vmem:[%s172 + $0x40] sm:$0xff] %vm424, %v353
      %434 = vst.msk [vmem:[%s172 + $0x48] sm:$0xff] %vm424, %v356
      %435 = vst.msk [vmem:[%s172 + $0x50] sm:$0xff] %vm424, %v359
      %436 = vst.msk [vmem:[%s172 + $0x58] sm:$0xff] %vm424, %v362
      %437 = vst.msk [vmem:[%s172 + $0x60] sm:$0xff] %vm424, %v365
      %438 = vst.msk [vmem:[%s172 + $0x68] sm:$0xff] %vm424, %v368
      %439 = vst.msk [vmem:[%s172 + $0x70] sm:$0xff] %vm424, %v371
      %440 = vst.msk [vmem:[%s172 + $0x78] sm:$0xff] %vm424, %v374
      %441 = vst.msk [vmem:[%s172 + $0x80] sm:$0xff] %vm424, %v377
      %442 = vst.msk [vmem:[%s172 + $0x88] sm:$0xff] %vm424, %v380
      %443 = vst.msk [vmem:[%s172 + $0x90] sm:$0xff] %vm424, %v383
      %444 = vst.msk [vmem:[%s172 + $0x98] sm:$0xff] %vm424, %v386
      %445 = vst.msk [vmem:[%s172 + $0xa0] sm:$0xff] %vm424, %v389
      %446 = vst.msk [vmem:[%s172 + $0xa8] sm:$0xff] %vm424, %v392
      %447 = vst.msk [vmem:[%s172 + $0xb0] sm:$0xff] %vm424, %v395
      %448 = vst.msk [vmem:[%s172 + $0xb8] sm:$0xff] %vm424, %v398
      %449 = vst.msk [vmem:[%s172 + $0xc0] sm:$0xff] %vm424, %v401
      %450 = vst.msk [vmem:[%s172 + $0xc8] sm:$0xff] %vm424, %v404
      %451 = vst.msk [vmem:[%s172 + $0xd0] sm:$0xff] %vm424, %v407
      %452 = vst.msk [vmem:[%s172 + $0xd8] sm:$0xff] %vm424, %v410
      %453 = vst.msk [vmem:[%s172 + $0xe0] sm:$0xff] %vm424, %v413
      %454 = vst.msk [vmem:[%s172 + $0xe8] sm:$0xff] %vm424, %v416
      %455 = vst.msk [vmem:[%s172 + $0xf0] sm:$0xff] %vm424, %v419
      %456 = vst.msk [vmem:[%s172 + $0xf8] sm:$0xff] %vm424, %v422
      %s457 = smul.u32 32, %s14
      %p458 = scmp.lt.s32.totalorder %s457, 63
      %s459 = scalar_select %p458, %s457, 63
      %s460 = smul.addr %s459, 8
      %s461 = scalar_lea.vmem %s3, %s460
      // Predicated region
      $region33: #{tpu_custom_call.1} parent=31 // pred_check
        %p462 = pneg %p100
      $region34: #{tpu_custom_call.1} parent=31 // pred_check_branch
        %464 = sbr.rel (%p462) target = $region36
      $region35: #{tpu_custom_call.1} parent=31 // pred_region
        %s465 = smul.u32 32, %s14
      $region36: #{tpu_custom_call.1} parent=31 // pred_fallthru
        _
    $region32: #{tpu_custom_call.1} parent=5 // pred_fallthru
      _
    %p466 = scmp.le.s32.totalorder 2, %s9
    // Predicated region
    $region37: #{tpu_custom_call.1} parent=5 // pred_check
      %p467 = pneg %p466
    $region38: #{tpu_custom_call.1} parent=5 // pred_check_branch
      %469 = sbr.rel (%p467) target = $region40
    $region39: #{tpu_custom_call.1} parent=5 // pred_region
      %s470 = ssub.s32 %s9, 2
      // Predicated region
      $region41: #{tpu_custom_call.1} parent=39 // pred_check
        %p471 = pneg %p106
      $region42: #{tpu_custom_call.1} parent=39 // pred_check_branch
        %473 = sbr.rel (%p471) target = $region44
      $region43: #{tpu_custom_call.1} parent=39 // pred_region
        %s474 = smul.u32 32, %s15
        %p475 = scmp.lt.s32.totalorder %s474, 63
        %s476 = scalar_select %p475, %s474, 63
        %s477 = smul.addr %s476, 8
        %s478 = scalar_lea.vmem %s3, %s477
      $region44: #{tpu_custom_call.1} parent=39 // pred_fallthru
        _
    $region40: #{tpu_custom_call.1} parent=5 // pred_fallthru
      _
  $region6: #{tpu_custom_call.1} parent=0 // loop_footer
    %s13 = sadd.s32 1, %s9
  $region7: #{tpu_custom_call.1} parent=0 // loop_footer_branch
    %8 = sbr.rel target = $region3
  $region8: #{tpu_custom_call.1} parent=0 // loop_exit
    _

</llo_original>
